<compile_context>
chip_gen: v7x
topology: tpu7x:2x2x1
jax: 0.10.0
libtpu: 0.0.40
codegen_flags: <defaults>
</compile_context>

<pallas_src>
import functools

import jax
import jax.numpy as jnp
from jax.experimental import pallas as pl
from jax.experimental.pallas import tpu as pltpu


def _round_up(x, m):
    return (x + m - 1) // m * m


# ----------------------------------------------------------------------------
# Fused kernel: implicit adjacency normalization + two GCNConv layers.
# ----------------------------------------------------------------------------
def _gcn_two_fused_kernel(adj_ref, x_ref, w1_ref, b1_ref, w2_ref, b2_ref, out_ref):
    # adj_ref: [Np, Np] (matmul dtype, zero diagonal, zero padded)
    # x_ref:   [Np, Fp] ; w1_ref: [Fp, H1p] ; b1_ref: [1, H1p] f32
    # w2_ref:  [H1p, H2p] ; b2_ref: [1, H2p] f32 ; out_ref: [Np, H2p] f32
    a = adj_ref[...]
    x = x_ref[...]

    # deg(A + I) = rowsum(A) + 1  (f32 accumulation; exact for 0/1 adjacency).
    deg = jnp.sum(a.astype(jnp.float32), axis=1, keepdims=True) + 1.0   # [Np, 1]
    dinv = jax.lax.rsqrt(deg)                                           # D^-1/2 (EUP), deg >= 1

    # ---- layer 1:  relu( norm @ (X @ W1) + b1 ) -----------------------------
    h1 = jnp.dot(x, w1_ref[...], preferred_element_type=jnp.float32)    # [Np, H1p] f32
    s1 = dinv * h1                                                       # row scaling (sublane-local)
    t1 = jnp.dot(a, s1.astype(a.dtype), preferred_element_type=jnp.float32) + s1
    x1 = jnp.maximum(dinv * t1 + b1_ref[...], 0.0)                       # relu; dropout p=0 -> identity

    # ---- layer 2:  norm @ (x1 @ W2) + b2 ------------------------------------
    h2 = jnp.dot(x1.astype(a.dtype), w2_ref[...], preferred_element_type=jnp.float32)
    s2 = dinv * h2
    t2 = jnp.dot(a, s2.astype(a.dtype), preferred_element_type=jnp.float32) + s2
    out_ref[...] = (dinv * t2 + b2_ref[...]).astype(out_ref.dtype)


# ----------------------------------------------------------------------------
# Wrapper: lane padding, dtype casts, cost/VMEM hints, single pallas_call.
# ----------------------------------------------------------------------------
@functools.partial(jax.jit, static_argnames=("matmul_dtype",))
def gcn_two_forward(params, feature, adj, *, matmul_dtype=jnp.bfloat16):
    n, f_in = feature.shape
    h1 = params["w1"].shape[1]
    h2 = params["w2"].shape[1]

    # Pad every dim to a multiple of 128: lane-dense stores, full MXU tiles.
    np_ = _round_up(n, 128)
    fp = _round_up(f_in, 128)
    h1p = _round_up(h1, 128)
    h2p = _round_up(h2, 128)

    def pad_cast(arr, rows, cols, dtype):
        arr = jnp.pad(arr, ((0, rows - arr.shape[0]), (0, cols - arr.shape[1])))
        return arr.astype(dtype)

    # Zero padding is semantically inert: padded nodes have no edges to real
    # nodes, padded feature columns hit zero weight rows, padded output
    # rows/cols are sliced off below.
    adj_p = pad_cast(adj, np_, np_, matmul_dtype)
    x_p = pad_cast(feature, np_, fp, matmul_dtype)
    w1_p = pad_cast(params["w1"], fp, h1p, matmul_dtype)
    b1_p = pad_cast(params["b1"], 1, h1p, jnp.float32)
    w2_p = pad_cast(params["w2"], h1p, h2p, matmul_dtype)
    b2_p = pad_cast(params["b2"], 1, h2p, jnp.float32)

    # Advisory cost estimate (two feature matmuls + two adjacency matmuls).
    flops = 2 * (np_ * fp * h1p + np_ * np_ * h1p
                 + np_ * h1p * h2p + np_ * np_ * h2p)
    item = jnp.dtype(matmul_dtype).itemsize
    in_bytes = item * (np_ * np_ + np_ * fp + fp * h1p + h1p * h2p) + 4 * (h1p + h2p)
    out_bytes = 4 * np_ * h2p
    cost = pl.CostEstimate(flops=flops, transcendentals=np_,
                           bytes_accessed=in_bytes + out_bytes)

    # VMEM budget: operands + output (x2 headroom) + f32 temporaries, clamped to
    # stay within v7x physical VMEM (64 MiB).
    tmp_bytes = 4 * np_ * (2 * h1p + 2 * h2p + 4) + item * np_ * max(h1p, h2p)
    vmem_limit = int(min(64 * 1024 * 1024,
                         max(16 * 1024 * 1024,
                             2 * (in_bytes + out_bytes) + tmp_bytes)))

    out_padded = pl.pallas_call(
        _gcn_two_fused_kernel,
        out_shape=jax.ShapeDtypeStruct((np_, h2p), jnp.float32),
        in_specs=[pl.BlockSpec(memory_space=pltpu.MemorySpace.VMEM)] * 6,
        out_specs=pl.BlockSpec(memory_space=pltpu.MemorySpace.VMEM),
        compiler_params=pltpu.CompilerParams(vmem_limit_bytes=vmem_limit),
        cost_estimate=cost,
    )(adj_p, x_p, w1_p, b1_p, w2_p, b2_p)

    return out_padded[:n, :h2]


# ----------------------------------------------------------------------------
# Parameter init (Glorot weights, zero biases — PyG GCNConv defaults).
# ----------------------------------------------------------------------------
def init_params(key, input_dim, hid_dim1, hid_dim2):
    k1, k2 = jax.random.split(key)

    def glorot(k, fan_in, fan_out):
        limit = jnp.sqrt(6.0 / (fan_in + fan_out))
        return jax.random.uniform(k, (fan_in, fan_out), jnp.float32, -limit, limit)

    return {
        "w1": glorot(k1, input_dim, hid_dim1),
        "b1": jnp.zeros((1, hid_dim1), jnp.float32),
        "w2": glorot(k2, hid_dim1, hid_dim2),
        "b2": jnp.zeros((1, hid_dim2), jnp.float32),
    }


# Pure-JAX f32 reference (materializes norm explicitly, like the PyTorch module).
def _ref_forward(params, feature, adj):
    n = adj.shape[0]
    a_hat = adj + jnp.eye(n, dtype=jnp.float32)
    deg = jnp.sum(a_hat, axis=1, keepdims=True)
    dinv = jnp.where(deg > 0, 1.0 / jnp.sqrt(deg), 0.0)
    norm = dinv * a_hat * dinv.reshape(1, n)
    x1 = jnp.maximum(norm @ (feature @ params["w1"]) + params["b1"], 0.0)
    return norm @ (x1 @ params["w2"]) + params["b2"]


if __name__ == "__main__":
    N, INPUT_DIM, HID1, HID2 = 64, 32, 64, 16

    key = jax.random.PRNGKey(0)
    k_feat, k_adj, k_param = jax.random.split(key, 3)

    feature = jax.random.normal(k_feat, (N, INPUT_DIM), jnp.float32)
    # random symmetric 0/1 adjacency, zero diagonal
    a = (jax.random.uniform(k_adj, (N, N)) < 0.1).astype(jnp.float32)
    adj = jnp.clip(a + a.T, 0.0, 1.0) * (1.0 - jnp.eye(N, dtype=jnp.float32))

    params = init_params(k_param, INPUT_DIM, HID1, HID2)
    ref = _ref_forward(params, feature, adj)

    # f32 matmul path: exact-algebra check against the reference.
    out_f32 = jax.block_until_ready(
        gcn_two_forward(params, feature, adj, matmul_dtype=jnp.float32))
    assert out_f32.shape == (N, HID2)
    assert jnp.allclose(out_f32, ref, atol=1e-4, rtol=1e-4)

    # bf16 matmul path (default performance path on v5e/v6e/v7x): loose check.
    out_bf16 = jax.block_until_ready(gcn_two_forward(params, feature, adj))
    assert out_bf16.shape == (N, HID2)
    assert jnp.allclose(out_bf16, ref, atol=5e-2, rtol=5e-2)

    print("KERNEL_OK")
</pallas_src>

<mosaic_0001>
module attributes {stable_mosaic.version = 11 : i64} {
  func.func @_gcn_two_fused_kernel(%arg0: memref<128x128xf32, #tpu.memory_space<vmem>>, %arg1: memref<128x128xf32, #tpu.memory_space<vmem>>, %arg2: memref<128x128xf32, #tpu.memory_space<vmem>>, %arg3: memref<1x128xf32, #tpu.memory_space<vmem>>, %arg4: memref<128x128xf32, #tpu.memory_space<vmem>>, %arg5: memref<1x128xf32, #tpu.memory_space<vmem>>, %arg6: memref<128x128xf32, #tpu.memory_space<vmem>>) attributes {dimension_semantics = [], scalar_prefetch = 0 : i64, scratch_operands = 0 : i64, tpu.core_type = #tpu.core_type<tc>} {
    %c0 = arith.constant 0 : index
    %c0_0 = arith.constant 0 : index
    %0 = vector.load %arg0[%c0, %c0_0] : memref<128x128xf32, #tpu.memory_space<vmem>>, vector<128x128xf32>
    %c0_1 = arith.constant 0 : index
    %c0_2 = arith.constant 0 : index
    %1 = vector.load %arg1[%c0_1, %c0_2] : memref<128x128xf32, #tpu.memory_space<vmem>>, vector<128x128xf32>
    %cst = arith.constant dense<0.000000e+00> : vector<128xf32>
    %2 = vector.multi_reduction <add>, %0, %cst [1] : vector<128x128xf32> to vector<128xf32>
    %3 = vector.shape_cast %2 : vector<128xf32> to vector<128x1xf32>
    %cst_3 = arith.constant 1.000000e+00 : f32
    %4 = vector.broadcast %cst_3 : f32 to vector<128x1xf32>
    %5 = arith.addf %3, %4 : vector<128x1xf32>
    %6 = math.rsqrt %5 : vector<128x1xf32>
    %c0_4 = arith.constant 0 : index
    %c0_5 = arith.constant 0 : index
    %7 = vector.load %arg2[%c0_4, %c0_5] : memref<128x128xf32, #tpu.memory_space<vmem>>, vector<128x128xf32>
    %cst_6 = arith.constant dense<0.000000e+00> : vector<128x128xf32>
    %8 = tpu.matmul %1, %7, %cst_6 {dimension_numbers = #tpu.dot_dimension_numbers<[1], [0], [0], [1], [0, 0, 1, 1], [], []>} : vector<128x128xf32>, vector<128x128xf32>, vector<128x128xf32> -> vector<128x128xf32>
    %9 = vector.broadcast %6 : vector<128x1xf32> to vector<128x128xf32>
    %10 = arith.mulf %9, %8 : vector<128x128xf32>
    %cst_7 = arith.constant dense<0.000000e+00> : vector<128x128xf32>
    %11 = tpu.matmul %0, %10, %cst_7 {dimension_numbers = #tpu.dot_dimension_numbers<[1], [0], [0], [1], [0, 0, 1, 1], [], []>} : vector<128x128xf32>, vector<128x128xf32>, vector<128x128xf32> -> vector<128x128xf32>
    %12 = arith.addf %11, %10 : vector<128x128xf32>
    %13 = vector.broadcast %6 : vector<128x1xf32> to vector<128x128xf32>
    %14 = arith.mulf %13, %12 : vector<128x128xf32>
    %c0_8 = arith.constant 0 : index
    %c0_9 = arith.constant 0 : index
    %15 = vector.load %arg3[%c0_8, %c0_9] : memref<1x128xf32, #tpu.memory_space<vmem>>, vector<1x128xf32>
    %16 = vector.broadcast %15 : vector<1x128xf32> to vector<128x128xf32>
    %17 = arith.addf %14, %16 : vector<128x128xf32>
    %cst_10 = arith.constant 0.000000e+00 : f32
    %18 = vector.broadcast %cst_10 : f32 to vector<128x128xf32>
    %19 = arith.maximumf %17, %18 : vector<128x128xf32>
    %c0_11 = arith.constant 0 : index
    %c0_12 = arith.constant 0 : index
    %20 = vector.load %arg4[%c0_11, %c0_12] : memref<128x128xf32, #tpu.memory_space<vmem>>, vector<128x128xf32>
    %cst_13 = arith.constant dense<0.000000e+00> : vector<128x128xf32>
    %21 = tpu.matmul %19, %20, %cst_13 {dimension_numbers = #tpu.dot_dimension_numbers<[1], [0], [0], [1], [0, 0, 1, 1], [], []>} : vector<128x128xf32>, vector<128x128xf32>, vector<128x128xf32> -> vector<128x128xf32>
    %22 = vector.broadcast %6 : vector<128x1xf32> to vector<128x128xf32>
    %23 = arith.mulf %22, %21 : vector<128x128xf32>
    %cst_14 = arith.constant dense<0.000000e+00> : vector<128x128xf32>
    %24 = tpu.matmul %0, %23, %cst_14 {dimension_numbers = #tpu.dot_dimension_numbers<[1], [0], [0], [1], [0, 0, 1, 1], [], []>} : vector<128x128xf32>, vector<128x128xf32>, vector<128x128xf32> -> vector<128x128xf32>
    %25 = arith.addf %24, %23 : vector<128x128xf32>
    %26 = vector.broadcast %6 : vector<128x1xf32> to vector<128x128xf32>
    %27 = arith.mulf %26, %25 : vector<128x128xf32>
    %c0_15 = arith.constant 0 : index
    %c0_16 = arith.constant 0 : index
    %28 = vector.load %arg5[%c0_15, %c0_16] : memref<1x128xf32, #tpu.memory_space<vmem>>, vector<1x128xf32>
    %29 = vector.broadcast %28 : vector<1x128xf32> to vector<128x128xf32>
    %30 = arith.addf %27, %29 : vector<128x128xf32>
    %c0_17 = arith.constant 0 : index
    %c0_18 = arith.constant 0 : index
    %31 = vector.load %arg6[%c0_17, %c0_18] : memref<128x128xf32, #tpu.memory_space<vmem>>, vector<128x128xf32>
    tpu.vector_store %arg6[%c0_17, %c0_18], %30 {strides = array<i32>} : memref<128x128xf32, #tpu.memory_space<vmem>>, vector<128x128xf32>,
    return
  }
}

</mosaic_0001>

<llo_original>
// kernel: gcn_two_forward.1
$region0: #{gcn_two_forward.1}
  #allocation0 [shape = 'u32[]', space=smem, size = 0x4, offset = 0x4, fixed_abs, tag = 'smem constant byte address 0x4 - core index']
  #allocation1 [shape = 'u32[144,128]{1,0:T(1,128)}', space=vmem, size = 0x12000, scoped, tag = 'internal scratch']
  %s0 = inlined_call_operand.vmem [shape: f32[128,128], index: 0, kind: input, shape index: {}]
  %s1 = inlined_call_operand.vmem [shape: f32[128,128], index: 1, kind: input, shape index: {}]
  %s2 = inlined_call_operand.vmem [shape: f32[128,128], index: 2, kind: input, shape index: {}]
  %s3 = inlined_call_operand.vmem [shape: f32[1,128], index: 3, kind: input, shape index: {}]
  %s4 = inlined_call_operand.vmem [shape: f32[128,128], index: 4, kind: input, shape index: {}]
  %s5 = inlined_call_operand.vmem [shape: f32[1,128], index: 5, kind: input, shape index: {}]
  %s6 = inlined_call_operand.vmem [shape: f32[128,128], index: 6, kind: output, shape index: {}]
  %s7 = sld [smem:[#allocation0]]
  $region34: #{gcn_two_forward.1} parent=0
    _
  %s9 = ssub.s32 1, %s7
  %s10 = scalar_select 0, %s9, %s7
  // Predicated region
  $region2: #{gcn_two_forward.1} parent=0 // pred_check
    _
  $region3: #{gcn_two_forward.1} parent=0 // pred_check_branch
    %12 = sbr.rel (0) target = $region5
  $region4: #{gcn_two_forward.1} parent=0 // pred_region
    _
  $region5: #{gcn_two_forward.1} parent=0 // pred_fallthru
    _
  // Predicated region
  $region6: #{gcn_two_forward.1} parent=0 // pred_check
    _
  $region7: #{gcn_two_forward.1} parent=0 // pred_check_branch
    %14 = sbr.rel (0) target = $region9
  $region8: #{gcn_two_forward.1} parent=0 // pred_region
    _
  $region9: #{gcn_two_forward.1} parent=0 // pred_fallthru
    _
  // Predicated region
  $region10: #{gcn_two_forward.1} parent=0 // pred_check
    _
  $region11: #{gcn_two_forward.1} parent=0 // pred_check_branch
    %16 = sbr.rel (0) target = $region13
  $region12: #{gcn_two_forward.1} parent=0 // pred_region
    _
  $region13: #{gcn_two_forward.1} parent=0 // pred_fallthru
    _
  // Predicated region
  $region14: #{gcn_two_forward.1} parent=0 // pred_check
    _
  $region15: #{gcn_two_forward.1} parent=0 // pred_check_branch
    %18 = sbr.rel (0) target = $region17
  $region16: #{gcn_two_forward.1} parent=0 // pred_region
    _
  $region17: #{gcn_two_forward.1} parent=0 // pred_fallthru
    _
  // Predicated region
  $region18: #{gcn_two_forward.1} parent=0 // pred_check
    _
  $region19: #{gcn_two_forward.1} parent=0 // pred_check_branch
    %20 = sbr.rel (0) target = $region21
  $region20: #{gcn_two_forward.1} parent=0 // pred_region
    _
  $region21: #{gcn_two_forward.1} parent=0 // pred_fallthru
    _
  // Predicated region
  $region22: #{gcn_two_forward.1} parent=0 // pred_check
    _
  $region23: #{gcn_two_forward.1} parent=0 // pred_check_branch
    %22 = sbr.rel (0) target = $region25
  $region24: #{gcn_two_forward.1} parent=0 // pred_region
    _
  $region25: #{gcn_two_forward.1} parent=0 // pred_fallthru
    _
  %v23 = vld [vmem:[%s0] sm:$0xff]
  %v24 = vld [vmem:[%s0 + $0x8] sm:$0xff]
  %v25 = vld [vmem:[%s0 + $0x10] sm:$0xff]
  %v26 = vld [vmem:[%s0 + $0x18] sm:$0xff]
  %v27 = vld [vmem:[%s0 + $0x20] sm:$0xff]
  %v28 = vld [vmem:[%s0 + $0x28] sm:$0xff]
  %v29 = vld [vmem:[%s0 + $0x30] sm:$0xff]
  %v30 = vld [vmem:[%s0 + $0x38] sm:$0xff]
  %v31 = vld [vmem:[%s0 + $0x40] sm:$0xff]
  %v32 = vld [vmem:[%s0 + $0x48] sm:$0xff]
  %v33 = vld [vmem:[%s0 + $0x50] sm:$0xff]
  %v34 = vld [vmem:[%s0 + $0x58] sm:$0xff]
  %v35 = vld [vmem:[%s0 + $0x60] sm:$0xff]
  %v36 = vld [vmem:[%s0 + $0x68] sm:$0xff]
  %v37 = vld [vmem:[%s0 + $0x70] sm:$0xff]
  %v38 = vld [vmem:[%s0 + $0x78] sm:$0xff]
  %v39 = vld [vmem:[%s1] sm:$0xff]
  %v40 = vld [vmem:[%s1 + $0x8] sm:$0xff]
  %v41 = vld [vmem:[%s1 + $0x10] sm:$0xff]
  %v42 = vld [vmem:[%s1 + $0x18] sm:$0xff]
  %v43 = vld [vmem:[%s1 + $0x20] sm:$0xff]
  %v44 = vld [vmem:[%s1 + $0x28] sm:$0xff]
  %v45 = vld [vmem:[%s1 + $0x30] sm:$0xff]
  %v46 = vld [vmem:[%s1 + $0x38] sm:$0xff]
  %v47 = vld [vmem:[%s1 + $0x40] sm:$0xff]
  %v48 = vld [vmem:[%s1 + $0x48] sm:$0xff]
  %v49 = vld [vmem:[%s1 + $0x50] sm:$0xff]
  %v50 = vld [vmem:[%s1 + $0x58] sm:$0xff]
  %v51 = vld [vmem:[%s1 + $0x60] sm:$0xff]
  %v52 = vld [vmem:[%s1 + $0x68] sm:$0xff]
  %v53 = vld [vmem:[%s1 + $0x70] sm:$0xff]
  %v54 = vld [vmem:[%s1 + $0x78] sm:$0xff]
  %55 = vadd.xlane.f32.xlu0 %v23
  %v56 = vpop.xlane.xlu0 %55
  %57 = vadd.xlane.f32.xlu0 %v24
  %v58 = vpop.xlane.xlu0 %57
  %59 = vadd.xlane.f32.xlu0 %v25
  %v60 = vpop.xlane.xlu0 %59
  %61 = vadd.xlane.f32.xlu0 %v26
  %v62 = vpop.xlane.xlu0 %61
  %63 = vadd.xlane.f32.xlu0 %v27
  %v64 = vpop.xlane.xlu0 %63
  %65 = vadd.xlane.f32.xlu0 %v28
  %v66 = vpop.xlane.xlu0 %65
  %67 = vadd.xlane.f32.xlu0 %v29
  %v68 = vpop.xlane.xlu0 %67
  %69 = vadd.xlane.f32.xlu0 %v30
  %v70 = vpop.xlane.xlu0 %69
  %71 = vadd.xlane.f32.xlu0 %v31
  %v72 = vpop.xlane.xlu0 %71
  %73 = vadd.xlane.f32.xlu0 %v32
  %v74 = vpop.xlane.xlu0 %73
  %75 = vadd.xlane.f32.xlu0 %v33
  %v76 = vpop.xlane.xlu0 %75
  %77 = vadd.xlane.f32.xlu0 %v34
  %v78 = vpop.xlane.xlu0 %77
  %79 = vadd.xlane.f32.xlu0 %v35
  %v80 = vpop.xlane.xlu0 %79
  %81 = vadd.xlane.f32.xlu0 %v36
  %v82 = vpop.xlane.xlu0 %81
  %83 = vadd.xlane.f32.xlu0 %v37
  %v84 = vpop.xlane.xlu0 %83
  %85 = vadd.xlane.f32.xlu0 %v38
  %v86 = vpop.xlane.xlu0 %85
  %v87 = vadd.f32 %v56, 1.0
  %v88 = vadd.f32 %v58, 1.0
  %v89 = vadd.f32 %v60, 1.0
  %v90 = vadd.f32 %v62, 1.0
  %v91 = vadd.f32 %v64, 1.0
  %v92 = vadd.f32 %v66, 1.0
  %v93 = vadd.f32 %v68, 1.0
  %v94 = vadd.f32 %v70, 1.0
  %v95 = vadd.f32 %v72, 1.0
  %v96 = vadd.f32 %v74, 1.0
  %v97 = vadd.f32 %v76, 1.0
  %v98 = vadd.f32 %v78, 1.0
  %v99 = vadd.f32 %v80, 1.0
  %v100 = vadd.f32 %v82, 1.0
  %v101 = vadd.f32 %v84, 1.0
  %v102 = vadd.f32 %v86, 1.0
  %v103 = vrsqrt.pop %v87
  %v104 = vrsqrt.pop %v88
  %v105 = vrsqrt.pop %v89
  %v106 = vrsqrt.pop %v90
  %v107 = vrsqrt.pop %v91
  %v108 = vrsqrt.pop %v92
  %v109 = vrsqrt.pop %v93
  %v110 = vrsqrt.pop %v94
  %v111 = vrsqrt.pop %v95
  %v112 = vrsqrt.pop %v96
  %v113 = vrsqrt.pop %v97
  %v114 = vrsqrt.pop %v98
  %v115 = vrsqrt.pop %v99
  %v116 = vrsqrt.pop %v100
  %v117 = vrsqrt.pop %v101
  %v118 = vrsqrt.pop %v102
  %v119 = vld [vmem:[%s2] sm:$0xff]
  %v120 = vld [vmem:[%s2 + $0x8] sm:$0xff]
  %v121 = vld [vmem:[%s2 + $0x10] sm:$0xff]
  %v122 = vld [vmem:[%s2 + $0x18] sm:$0xff]
  %v123 = vld [vmem:[%s2 + $0x20] sm:$0xff]
  %v124 = vld [vmem:[%s2 + $0x28] sm:$0xff]
  %v125 = vld [vmem:[%s2 + $0x30] sm:$0xff]
  %v126 = vld [vmem:[%s2 + $0x38] sm:$0xff]
  %v127 = vld [vmem:[%s2 + $0x40] sm:$0xff]
  %v128 = vld [vmem:[%s2 + $0x48] sm:$0xff]
  %v129 = vld [vmem:[%s2 + $0x50] sm:$0xff]
  %v130 = vld [vmem:[%s2 + $0x58] sm:$0xff]
  %v131 = vld [vmem:[%s2 + $0x60] sm:$0xff]
  %v132 = vld [vmem:[%s2 + $0x68] sm:$0xff]
  %v133 = vld [vmem:[%s2 + $0x70] sm:$0xff]
  %v134 = vld [vmem:[%s2 + $0x78] sm:$0xff]
  %135 = vmatprep.subr.mxu0 0.0
  %136 = vmatpush1.msra.mxu0 %v119
  %137 = vmatprep.subr.mxu0 0.0
  %138 = vmatpush1.msra.mxu0 %v120
  %139 = vmatprep.subr.mxu0 0.0
  %140 = vmatpush1.msra.mxu0 %v121
  %141 = vmatprep.subr.mxu0 0.0
  %142 = vmatpush1.msra.mxu0 %v122
  %143 = vmatprep.subr.mxu0 0.0
  %144 = vmatpush1.msra.mxu0 %v123
  %145 = vmatprep.subr.mxu0 0.0
  %146 = vmatpush1.msra.mxu0 %v124
  %147 = vmatprep.subr.mxu0 0.0
  %148 = vmatpush1.msra.mxu0 %v125
  %149 = vmatprep.subr.mxu0 0.0
  %150 = vmatpush1.msra.mxu0 %v126
  %151 = vmatprep.subr.mxu0 0.0
  %152 = vmatpush1.msra.mxu0 %v127
  %153 = vmatprep.subr.mxu0 0.0
  %154 = vmatpush1.msra.mxu0 %v128
  %155 = vmatprep.subr.mxu0 0.0
  %156 = vmatpush1.msra.mxu0 %v129
  %157 = vmatprep.subr.mxu0 0.0
  %158 = vmatpush1.msra.mxu0 %v130
  %159 = vmatprep.subr.mxu0 0.0
  %160 = vmatpush1.msra.mxu0 %v131
  %161 = vmatprep.subr.mxu0 0.0
  %162 = vmatpush1.msra.mxu0 %v132
  %163 = vmatprep.subr.mxu0 0.0
  %164 = vmatpush1.msra.mxu0 %v133
  %165 = vmatprep.subr.mxu0 0.0
  %166 = vmatpush1.msra.mxu0 %v134
  %167 = vmatprep.subr.mxu0 0.0
  %168 = vmatpush1.msra.mxu0 0.0
  %169 = vmatprep.subr.mxu0 0.0
  %170 = vmatpush1.msra.mxu0 0.0
  %171 = vmatprep.subr.mxu0 0.0
  %172 = vmatpush1.msra.mxu0 0.0
  %173 = vmatprep.subr.mxu0 0.0
  %174 = vmatpush1.msra.mxu0 0.0
  %175 = vmatprep.subr.mxu0 0.0
  %176 = vmatpush1.msra.mxu0 0.0
  %177 = vmatprep.subr.mxu0 0.0
  %178 = vmatpush1.msra.mxu0 0.0
  %179 = vmatprep.subr.mxu0 0.0
  %180 = vmatpush1.msra.mxu0 0.0
  %181 = vmatprep.subr.mxu0 0.0
  %182 = vmatpush1.msra.mxu0 0.0
  %183 = vmatprep.subr.mxu0 0.0
  %184 = vmatpush1.msra.mxu0 0.0
  %185 = vmatprep.subr.mxu0 0.0
  %186 = vmatpush1.msra.mxu0 0.0
  %187 = vmatprep.subr.mxu0 0.0
  %188 = vmatpush1.msra.mxu0 0.0
  %189 = vmatprep.subr.mxu0 0.0
  %190 = vmatpush1.msra.mxu0 0.0
  %191 = vmatprep.subr.mxu0 0.0
  %192 = vmatpush1.msra.mxu0 0.0
  %193 = vmatprep.subr.mxu0 0.0
  %194 = vmatpush1.msra.mxu0 0.0
  %195 = vmatprep.subr.mxu0 0.0
  %196 = vmatpush1.msra.mxu0 0.0
  %197 = vmatprep.subr.mxu0 0.0
  %198 = vmatpush1.msra.mxu0 0.0
  %199 = vmatprep.mubr.f32.mxu0 0.0
  %200 = vmatmul.mubr.f32.gmra.mrb[0].mxu0 %v39
  %v201 = vpop.f32.mrb[0].mxu0
  %v202 = vadd.f32 0.0, %v201
  %v203 = vpop.f32.mrb[0].mxu0
  %204 = vmatprep.mubr.f32.mxu0 0.0
  %205 = vmatmul.mubr.f32.gmra.mrb[0].mxu0 %v40
  %v206 = vpop.f32.mrb[0].mxu0
  %v207 = vadd.f32 0.0, %v206
  %v208 = vpop.f32.mrb[0].mxu0
  %209 = vmatprep.mubr.f32.mxu0 0.0
  %210 = vmatmul.mubr.f32.gmra.mrb[0].mxu0 %v41
  %v211 = vpop.f32.mrb[0].mxu0
  %v212 = vadd.f32 0.0, %v211
  %v213 = vpop.f32.mrb[0].mxu0
  %214 = vmatprep.mubr.f32.mxu0 0.0
  %215 = vmatmul.mubr.f32.gmra.mrb[0].mxu0 %v42
  %v216 = vpop.f32.mrb[0].mxu0
  %v217 = vadd.f32 0.0, %v216
  %v218 = vpop.f32.mrb[0].mxu0
  %219 = vmatprep.mubr.f32.mxu0 0.0
  %220 = vmatmul.mubr.f32.gmra.mrb[0].mxu0 %v43
  %v221 = vpop.f32.mrb[0].mxu0
  %v222 = vadd.f32 0.0, %v221
  %v223 = vpop.f32.mrb[0].mxu0
  %224 = vmatprep.mubr.f32.mxu0 0.0
  %225 = vmatmul.mubr.f32.gmra.mrb[0].mxu0 %v44
  %v226 = vpop.f32.mrb[0].mxu0
  %v227 = vadd.f32 0.0, %v226
  %v228 = vpop.f32.mrb[0].mxu0
  %229 = vmatprep.mubr.f32.mxu0 0.0
  %230 = vmatmul.mubr.f32.gmra.mrb[0].mxu0 %v45
  %v231 = vpop.f32.mrb[0].mxu0
  %v232 = vadd.f32 0.0, %v231
  %v233 = vpop.f32.mrb[0].mxu0
  %234 = vmatprep.mubr.f32.mxu0 0.0
  %235 = vmatmul.mubr.f32.gmra.mrb[0].mxu0 %v46
  %v236 = vpop.f32.mrb[0].mxu0
  %v237 = vadd.f32 0.0, %v236
  %v238 = vpop.f32.mrb[0].mxu0
  %239 = vmatprep.mubr.f32.mxu0 0.0
  %240 = vmatmul.mubr.f32.gmra.mrb[0].mxu0 %v47
  %v241 = vpop.f32.mrb[0].mxu0
  %v242 = vadd.f32 0.0, %v241
  %v243 = vpop.f32.mrb[0].mxu0
  %244 = vmatprep.mubr.f32.mxu0 0.0
  %245 = vmatmul.mubr.f32.gmra.mrb[0].mxu0 %v48
  %v246 = vpop.f32.mrb[0].mxu0
  %v247 = vadd.f32 0.0, %v246
  %v248 = vpop.f32.mrb[0].mxu0
  %249 = vmatprep.mubr.f32.mxu0 0.0
  %250 = vmatmul.mubr.f32.gmra.mrb[0].mxu0 %v49
  %v251 = vpop.f32.mrb[0].mxu0
  %v252 = vadd.f32 0.0, %v251
  %v253 = vpop.f32.mrb[0].mxu0
  %254 = vmatprep.mubr.f32.mxu0 0.0
  %255 = vmatmul.mubr.f32.gmra.mrb[0].mxu0 %v50
  %v256 = vpop.f32.mrb[0].mxu0
  %v257 = vadd.f32 0.0, %v256
  %v258 = vpop.f32.mrb[0].mxu0
  %259 = vmatprep.mubr.f32.mxu0 0.0
  %260 = vmatmul.mubr.f32.gmra.mrb[0].mxu0 %v51
  %v261 = vpop.f32.mrb[0].mxu0
  %v262 = vadd.f32 0.0, %v261
  %v263 = vpop.f32.mrb[0].mxu0
  %264 = vmatprep.mubr.f32.mxu0 0.0
  %265 = vmatmul.mubr.f32.gmra.mrb[0].mxu0 %v52
  %v266 = vpop.f32.mrb[0].mxu0
  %v267 = vadd.f32 0.0, %v266
  %v268 = vpop.f32.mrb[0].mxu0
  %269 = vmatprep.mubr.f32.mxu0 0.0
  %270 = vmatmul.mubr.f32.gmra.mrb[0].mxu0 %v53
  %v271 = vpop.f32.mrb[0].mxu0
  %v272 = vadd.f32 0.0, %v271
  %v273 = vpop.f32.mrb[0].mxu0
  %274 = vmatprep.mubr.f32.mxu0 0.0
  %275 = vmatmul.mubr.f32.gmra.mrb[0].mxu0 %v54
  %v276 = vpop.f32.mrb[0].mxu0
  %v277 = vadd.f32 0.0, %v276
  %v278 = vpop.f32.mrb[0].mxu0
  %279 = vdwg.mxu0
  %v280 = vmul.f32 %v103, %v202
  %v281 = vmul.f32 %v104, %v207
  %v282 = vmul.f32 %v105, %v212
  %v283 = vmul.f32 %v106, %v217
  %v284 = vmul.f32 %v107, %v222
  %v285 = vmul.f32 %v108, %v227
  %v286 = vmul.f32 %v109, %v232
  %v287 = vmul.f32 %v110, %v237
  %v288 = vmul.f32 %v111, %v242
  %v289 = vmul.f32 %v112, %v247
  %v290 = vmul.f32 %v113, %v252
  %v291 = vmul.f32 %v114, %v257
  %v292 = vmul.f32 %v115, %v262
  %v293 = vmul.f32 %v116, %v267
  %v294 = vmul.f32 %v117, %v272
  %v295 = vmul.f32 %v118, %v277
  %296 = vmatprep.subr.mxu0 0.0
  %297 = vmatpush1.msra.mxu0 %v280
  %298 = vmatprep.subr.mxu0 0.0
  %299 = vmatpush1.msra.mxu0 %v281
  %300 = vmatprep.subr.mxu0 0.0
  %301 = vmatpush1.msra.mxu0 %v282
  %302 = vmatprep.subr.mxu0 0.0
  %303 = vmatpush1.msra.mxu0 %v283
  %304 = vmatprep.subr.mxu0 0.0
  %305 = vmatpush1.msra.mxu0 %v284
  %306 = vmatprep.subr.mxu0 0.0
  %307 = vmatpush1.msra.mxu0 %v285
  %308 = vmatprep.subr.mxu0 0.0
  %309 = vmatpush1.msra.mxu0 %v286
  %310 = vmatprep.subr.mxu0 0.0
  %311 = vmatpush1.msra.mxu0 %v287
  %312 = vmatprep.subr.mxu0 0.0
  %313 = vmatpush1.msra.mxu0 %v288
  %314 = vmatprep.subr.mxu0 0.0
  %315 = vmatpush1.msra.mxu0 %v289
  %316 = vmatprep.subr.mxu0 0.0
  %317 = vmatpush1.msra.mxu0 %v290
  %318 = vmatprep.subr.mxu0 0.0
  %319 = vmatpush1.msra.mxu0 %v291
  %320 = vmatprep.subr.mxu0 0.0
  %321 = vmatpush1.msra.mxu0 %v292
  %322 = vmatprep.subr.mxu0 0.0
  %323 = vmatpush1.msra.mxu0 %v293
  %324 = vmatprep.subr.mxu0 0.0
  %325 = vmatpush1.msra.mxu0 %v294
  %326 = vmatprep.subr.mxu0 0.0
  %327 = vmatpush1.msra.mxu0 %v295
  %328 = vmatprep.subr.mxu0 0.0
  %329 = vmatpush1.msra.mxu0 0.0
  %330 = vmatprep.subr.mxu0 0.0
  %331 = vmatpush1.msra.mxu0 0.0
  %332 = vmatprep.subr.mxu0 0.0
  %333 = vmatpush1.msra.mxu0 0.0
  %334 = vmatprep.subr.mxu0 0.0
  %335 = vmatpush1.msra.mxu0 0.0
  %336 = vmatprep.subr.mxu0 0.0
  %337 = vmatpush1.msra.mxu0 0.0
  %338 = vmatprep.subr.mxu0 0.0
  %339 = vmatpush1.msra.mxu0 0.0
  %340 = vmatprep.subr.mxu0 0.0
  %341 = vmatpush1.msra.mxu0 0.0
  %342 = vmatprep.subr.mxu0 0.0
  %343 = vmatpush1.msra.mxu0 0.0
  %344 = vmatprep.subr.mxu0 0.0
  %345 = vmatpush1.msra.mxu0 0.0
  %346 = vmatprep.subr.mxu0 0.0
  %347 = vmatpush1.msra.mxu0 0.0
  %348 = vmatprep.subr.mxu0 0.0
  %349 = vmatpush1.msra.mxu0 0.0
  %350 = vmatprep.subr.mxu0 0.0
  %351 = vmatpush1.msra.mxu0 0.0
  %352 = vmatprep.subr.mxu0 0.0
  %353 = vmatpush1.msra.mxu0 0.0
  %354 = vmatprep.subr.mxu0 0.0
  %355 = vmatpush1.msra.mxu0 0.0
  %356 = vmatprep.subr.mxu0 0.0
  %357 = vmatpush1.msra.mxu0 0.0
  %358 = vmatprep.subr.mxu0 0.0
  %359 = vmatpush1.msra.mxu0 0.0
  %360 = vmatprep.mubr.f32.mxu0 0.0
  %361 = vmatmul.mubr.f32.gmra.mrb[0].mxu0 %v23
  %v362 = vpop.f32.mrb[0].mxu0
  %v363 = vadd.f32 %v280, %v362
  %v364 = vpop.f32.mrb[0].mxu0
  %365 = vmatprep.mubr.f32.mxu0 0.0
  %366 = vmatmul.mubr.f32.gmra.mrb[0].mxu0 %v24
  %v367 = vpop.f32.mrb[0].mxu0
  %v368 = vadd.f32 %v281, %v367
  %v369 = vpop.f32.mrb[0].mxu0
  %370 = vmatprep.mubr.f32.mxu0 0.0
  %371 = vmatmul.mubr.f32.gmra.mrb[0].mxu0 %v25
  %v372 = vpop.f32.mrb[0].mxu0
  %v373 = vadd.f32 %v282, %v372
  %v374 = vpop.f32.mrb[0].mxu0
  %375 = vmatprep.mubr.f32.mxu0 0.0
  %376 = vmatmul.mubr.f32.gmra.mrb[0].mxu0 %v26
  %v377 = vpop.f32.mrb[0].mxu0
  %v378 = vadd.f32 %v283, %v377
  %v379 = vpop.f32.mrb[0].mxu0
  %380 = vmatprep.mubr.f32.mxu0 0.0
  %381 = vmatmul.mubr.f32.gmra.mrb[0].mxu0 %v27
  %v382 = vpop.f32.mrb[0].mxu0
  %v383 = vadd.f32 %v284, %v382
  %v384 = vpop.f32.mrb[0].mxu0
  %385 = vmatprep.mubr.f32.mxu0 0.0
  %386 = vmatmul.mubr.f32.gmra.mrb[0].mxu0 %v28
  %v387 = vpop.f32.mrb[0].mxu0
  %v388 = vadd.f32 %v285, %v387
  %v389 = vpop.f32.mrb[0].mxu0
  %390 = vmatprep.mubr.f32.mxu0 0.0
  %391 = vmatmul.mubr.f32.gmra.mrb[0].mxu0 %v29
  %v392 = vpop.f32.mrb[0].mxu0
  %v393 = vadd.f32 %v286, %v392
  %v394 = vpop.f32.mrb[0].mxu0
  %395 = vmatprep.mubr.f32.mxu0 0.0
  %396 = vmatmul.mubr.f32.gmra.mrb[0].mxu0 %v30
  %v397 = vpop.f32.mrb[0].mxu0
  %v398 = vadd.f32 %v287, %v397
  %v399 = vpop.f32.mrb[0].mxu0
  %400 = vmatprep.mubr.f32.mxu0 0.0
  %401 = vmatmul.mubr.f32.gmra.mrb[0].mxu0 %v31
  %v402 = vpop.f32.mrb[0].mxu0
  %v403 = vadd.f32 %v288, %v402
  %v404 = vpop.f32.mrb[0].mxu0
  %405 = vmatprep.mubr.f32.mxu0 0.0
  %406 = vmatmul.mubr.f32.gmra.mrb[0].mxu0 %v32
  %v407 = vpop.f32.mrb[0].mxu0
  %v408 = vadd.f32 %v289, %v407
  %v409 = vpop.f32.mrb[0].mxu0
  %410 = vmatprep.mubr.f32.mxu0 0.0
  %411 = vmatmul.mubr.f32.gmra.mrb[0].mxu0 %v33
  %v412 = vpop.f32.mrb[0].mxu0
  %v413 = vadd.f32 %v290, %v412
  %v414 = vpop.f32.mrb[0].mxu0
  %415 = vmatprep.mubr.f32.mxu0 0.0
  %416 = vmatmul.mubr.f32.gmra.mrb[0].mxu0 %v34
  %v417 = vpop.f32.mrb[0].mxu0
  %v418 = vadd.f32 %v291, %v417
  %v419 = vpop.f32.mrb[0].mxu0
  %420 = vmatprep.mubr.f32.mxu0 0.0
  %421 = vmatmul.mubr.f32.gmra.mrb[0].mxu0 %v35
  %v422 = vpop.f32.mrb[0].mxu0
  %v423 = vadd.f32 %v292, %v422
  %v424 = vpop.f32.mrb[0].mxu0
  %425 = vmatprep.mubr.f32.mxu0 0.0
  %426 = vmatmul.mubr.f32.gmra.mrb[0].mxu0 %v36
  %v427 = vpop.f32.mrb[0].mxu0
  %v428 = vadd.f32 %v293, %v427
  %v429 = vpop.f32.mrb[0].mxu0
  %430 = vmatprep.mubr.f32.mxu0 0.0
  %431 = vmatmul.mubr.f32.gmra.mrb[0].mxu0 %v37
  %v432 = vpop.f32.mrb[0].mxu0
  %v433 = vadd.f32 %v294, %v432
  %v434 = vpop.f32.mrb[0].mxu0
  %435 = vmatprep.mubr.f32.mxu0 0.0
  %436 = vmatmul.mubr.f32.gmra.mrb[0].mxu0 %v38
  %v437 = vpop.f32.mrb[0].mxu0
  %v438 = vadd.f32 %v295, %v437
  %v439 = vpop.f32.mrb[0].mxu0
  %440 = vdwg.mxu0
  %v441 = vmul.f32 %v103, %v363
  %v442 = vmul.f32 %v104, %v368
  %v443 = vmul.f32 %v105, %v373
  %v444 = vmul.f32 %v106, %v378
  %v445 = vmul.f32 %v107, %v383
  %v446 = vmul.f32 %v108, %v388
  %v447 = vmul.f32 %v109, %v393
  %v448 = vmul.f32 %v110, %v398
  %v449 = vmul.f32 %v111, %v403
  %v450 = vmul.f32 %v112, %v408
  %v451 = vmul.f32 %v113, %v413
  %v452 = vmul.f32 %v114, %v418
  %v453 = vmul.f32 %v115, %v423
  %v454 = vmul.f32 %v116, %v428
  %v455 = vmul.f32 %v117, %v433
  %v456 = vmul.f32 %v118, %v438
  %v457 = vld [vmem:[%s3] sm:$0x1]
  %v459 = vlaneseq
  %v460 = vshrl.u32 %v459, 7
  %v461 = vsub.s32 0, %v460
  %v462 = vrot.slane %v457, %v461
  %v464 = vadd.f32 %v441, %v462
  %v465 = vadd.f32 %v442, %v462
  %v466 = vadd.f32 %v443, %v462
  %v467 = vadd.f32 %v444, %v462
  %v468 = vadd.f32 %v445, %v462
  %v469 = vadd.f32 %v446, %v462
  %v470 = vadd.f32 %v447, %v462
  %v471 = vadd.f32 %v448, %v462
  %v472 = vadd.f32 %v449, %v462
  %v473 = vadd.f32 %v450, %v462
  %v474 = vadd.f32 %v451, %v462
  %v475 = vadd.f32 %v452, %v462
  %v476 = vadd.f32 %v453, %v462
  %v477 = vadd.f32 %v454, %v462
  %v478 = vadd.f32 %v455, %v462
  %v479 = vadd.f32 %v456, %v462
  %v480 = vmax.f32 %v464, 0.0
  %v481 = vmax.f32 %v465, 0.0
  %v482 = vmax.f32 %v466, 0.0
  %v483 = vmax.f32 %v467, 0.0
  %v484 = vmax.f32 %v468, 0.0
  %v485 = vmax.f32 %v469, 0.0
  %v486 = vmax.f32 %v470, 0.0
  %v487 = vmax.f32 %v471, 0.0
  %v488 = vmax.f32 %v472, 0.0
  %v489 = vmax.f32 %v473, 0.0
  %v490 = vmax.f32 %v474, 0.0
  %v491 = vmax.f32 %v475, 0.0
  %v492 = vmax.f32 %v476, 0.0
  %v493 = vmax.f32 %v477, 0.0
  %v494 = vmax.f32 %v478, 0.0
  %v495 = vmax.f32 %v479, 0.0
  %v496 = vld [vmem:[%s4] sm:$0xff]
  %v497 = vld [vmem:[%s4 + $0x8] sm:$0xff]
  %v498 = vld [vmem:[%s4 + $0x10] sm:$0xff]
  %v499 = vld [vmem:[%s4 + $0x18] sm:$0xff]
  %v500 = vld [vmem:[%s4 + $0x20] sm:$0xff]
  %v501 = vld [vmem:[%s4 + $0x28] sm:$0xff]
  %v502 = vld [vmem:[%s4 + $0x30] sm:$0xff]
  %v503 = vld [vmem:[%s4 + $0x38] sm:$0xff]
  %v504 = vld [vmem:[%s4 + $0x40] sm:$0xff]
  %v505 = vld [vmem:[%s4 + $0x48] sm:$0xff]
  %v506 = vld [vmem:[%s4 + $0x50] sm:$0xff]
  %v507 = vld [vmem:[%s4 + $0x58] sm:$0xff]
  %v508 = vld [vmem:[%s4 + $0x60] sm:$0xff]
  %v509 = vld [vmem:[%s4 + $0x68] sm:$0xff]
  %v510 = vld [vmem:[%s4 + $0x70] sm:$0xff]
  %v511 = vld [vmem:[%s4 + $0x78] sm:$0xff]
  %512 = vmatprep.subr.mxu0 0.0
  %513 = vmatpush1.msra.mxu0 %v496
  %514 = vmatprep.subr.mxu0 0.0
  %515 = vmatpush1.msra.mxu0 %v497
  %516 = vmatprep.subr.mxu0 0.0
  %517 = vmatpush1.msra.mxu0 %v498
  %518 = vmatprep.subr.mxu0 0.0
  %519 = vmatpush1.msra.mxu0 %v499
  %520 = vmatprep.subr.mxu0 0.0
  %521 = vmatpush1.msra.mxu0 %v500
  %522 = vmatprep.subr.mxu0 0.0
  %523 = vmatpush1.msra.mxu0 %v501
  %524 = vmatprep.subr.mxu0 0.0
  %525 = vmatpush1.msra.mxu0 %v502
  %526 = vmatprep.subr.mxu0 0.0
  %527 = vmatpush1.msra.mxu0 %v503
  %528 = vmatprep.subr.mxu0 0.0
  %529 = vmatpush1.msra.mxu0 %v504
  %530 = vmatprep.subr.mxu0 0.0
  %531 = vmatpush1.msra.mxu0 %v505
  %532 = vmatprep.subr.mxu0 0.0
  %533 = vmatpush1.msra.mxu0 %v506
  %534 = vmatprep.subr.mxu0 0.0
  %535 = vmatpush1.msra.mxu0 %v507
  %536 = vmatprep.subr.mxu0 0.0
  %537 = vmatpush1.msra.mxu0 %v508
  %538 = vmatprep.subr.mxu0 0.0
  %539 = vmatpush1.msra.mxu0 %v509
  %540 = vmatprep.subr.mxu0 0.0
  %541 = vmatpush1.msra.mxu0 %v510
  %542 = vmatprep.subr.mxu0 0.0
  %543 = vmatpush1.msra.mxu0 %v511
  %544 = vmatprep.subr.mxu0 0.0
  %545 = vmatpush1.msra.mxu0 0.0
  %546 = vmatprep.subr.mxu0 0.0
  %547 = vmatpush1.msra.mxu0 0.0
  %548 = vmatprep.subr.mxu0 0.0
  %549 = vmatpush1.msra.mxu0 0.0
  %550 = vmatprep.subr.mxu0 0.0
  %551 = vmatpush1.msra.mxu0 0.0
  %552 = vmatprep.subr.mxu0 0.0
  %553 = vmatpush1.msra.mxu0 0.0
  %554 = vmatprep.subr.mxu0 0.0
  %555 = vmatpush1.msra.mxu0 0.0
  %556 = vmatprep.subr.mxu0 0.0
  %557 = vmatpush1.msra.mxu0 0.0
  %558 = vmatprep.subr.mxu0 0.0
  %559 = vmatpush1.msra.mxu0 0.0
  %560 = vmatprep.subr.mxu0 0.0
  %561 = vmatpush1.msra.mxu0 0.0
  %562 = vmatprep.subr.mxu0 0.0
  %563 = vmatpush1.msra.mxu0 0.0
  %564 = vmatprep.subr.mxu0 0.0
  %565 = vmatpush1.msra.mxu0 0.0
  %566 = vmatprep.subr.mxu0 0.0
  %567 = vmatpush1.msra.mxu0 0.0
  %568 = vmatprep.subr.mxu0 0.0
  %569 = vmatpush1.msra.mxu0 0.0
  %570 = vmatprep.subr.mxu0 0.0
  %571 = vmatpush1.msra.mxu0 0.0
  %572 = vmatprep.subr.mxu0 0.0
  %573 = vmatpush1.msra.mxu0 0.0
  %574 = vmatprep.subr.mxu0 0.0
  %575 = vmatpush1.msra.mxu0 0.0
  %576 = vmatprep.mubr.f32.mxu0 0.0
  %577 = vmatmul.mubr.f32.gmra.mrb[0].mxu0 %v480
  %v578 = vpop.f32.mrb[0].mxu0
  %v579 = vadd.f32 0.0, %v578
  %v580 = vpop.f32.mrb[0].mxu0
  %581 = vmatprep.mubr.f32.mxu0 0.0
  %582 = vmatmul.mubr.f32.gmra.mrb[0].mxu0 %v481
  %v583 = vpop.f32.mrb[0].mxu0
  %v584 = vadd.f32 0.0, %v583
  %v585 = vpop.f32.mrb[0].mxu0
  %586 = vmatprep.mubr.f32.mxu0 0.0
  %587 = vmatmul.mubr.f32.gmra.mrb[0].mxu0 %v482
  %v588 = vpop.f32.mrb[0].mxu0
  %v589 = vadd.f32 0.0, %v588
  %v590 = vpop.f32.mrb[0].mxu0
  %591 = vmatprep.mubr.f32.mxu0 0.0
  %592 = vmatmul.mubr.f32.gmra.mrb[0].mxu0 %v483
  %v593 = vpop.f32.mrb[0].mxu0
  %v594 = vadd.f32 0.0, %v593
  %v595 = vpop.f32.mrb[0].mxu0
  %596 = vmatprep.mubr.f32.mxu0 0.0
  %597 = vmatmul.mubr.f32.gmra.mrb[0].mxu0 %v484
  %v598 = vpop.f32.mrb[0].mxu0
  %v599 = vadd.f32 0.0, %v598
  %v600 = vpop.f32.mrb[0].mxu0
  %601 = vmatprep.mubr.f32.mxu0 0.0
  %602 = vmatmul.mubr.f32.gmra.mrb[0].mxu0 %v485
  %v603 = vpop.f32.mrb[0].mxu0
  %v604 = vadd.f32 0.0, %v603
  %v605 = vpop.f32.mrb[0].mxu0
  %606 = vmatprep.mubr.f32.mxu0 0.0
  %607 = vmatmul.mubr.f32.gmra.mrb[0].mxu0 %v486
  %v608 = vpop.f32.mrb[0].mxu0
  %v609 = vadd.f32 0.0, %v608
  %v610 = vpop.f32.mrb[0].mxu0
  %611 = vmatprep.mubr.f32.mxu0 0.0
  %612 = vmatmul.mubr.f32.gmra.mrb[0].mxu0 %v487
  %v613 = vpop.f32.mrb[0].mxu0
  %v614 = vadd.f32 0.0, %v613
  %v615 = vpop.f32.mrb[0].mxu0
  %616 = vmatprep.mubr.f32.mxu0 0.0
  %617 = vmatmul.mubr.f32.gmra.mrb[0].mxu0 %v488
  %v618 = vpop.f32.mrb[0].mxu0
  %v619 = vadd.f32 0.0, %v618
  %v620 = vpop.f32.mrb[0].mxu0
  %621 = vmatprep.mubr.f32.mxu0 0.0
  %622 = vmatmul.mubr.f32.gmra.mrb[0].mxu0 %v489
  %v623 = vpop.f32.mrb[0].mxu0
  %v624 = vadd.f32 0.0, %v623
  %v625 = vpop.f32.mrb[0].mxu0
  %626 = vmatprep.mubr.f32.mxu0 0.0
  %627 = vmatmul.mubr.f32.gmra.mrb[0].mxu0 %v490
  %v628 = vpop.f32.mrb[0].mxu0
  %v629 = vadd.f32 0.0, %v628
  %v630 = vpop.f32.mrb[0].mxu0
  %631 = vmatprep.mubr.f32.mxu0 0.0
  %632 = vmatmul.mubr.f32.gmra.mrb[0].mxu0 %v491
  %v633 = vpop.f32.mrb[0].mxu0
  %v634 = vadd.f32 0.0, %v633
  %v635 = vpop.f32.mrb[0].mxu0
  %636 = vmatprep.mubr.f32.mxu0 0.0
  %637 = vmatmul.mubr.f32.gmra.mrb[0].mxu0 %v492
  %v638 = vpop.f32.mrb[0].mxu0
  %v639 = vadd.f32 0.0, %v638
  %v640 = vpop.f32.mrb[0].mxu0
  %641 = vmatprep.mubr.f32.mxu0 0.0
  %642 = vmatmul.mubr.f32.gmra.mrb[0].mxu0 %v493
  %v643 = vpop.f32.mrb[0].mxu0
  %v644 = vadd.f32 0.0, %v643
  %v645 = vpop.f32.mrb[0].mxu0
  %646 = vmatprep.mubr.f32.mxu0 0.0
  %647 = vmatmul.mubr.f32.gmra.mrb[0].mxu0 %v494
  %v648 = vpop.f32.mrb[0].mxu0
  %v649 = vadd.f32 0.0, %v648
  %v650 = vpop.f32.mrb[0].mxu0
  %651 = vmatprep.mubr.f32.mxu0 0.0
  %652 = vmatmul.mubr.f32.gmra.mrb[0].mxu0 %v495
  %v653 = vpop.f32.mrb[0].mxu0
  %v654 = vadd.f32 0.0, %v653
  %v655 = vpop.f32.mrb[0].mxu0
  %656 = vdwg.mxu0
  %v657 = vmul.f32 %v103, %v579
  %v658 = vmul.f32 %v104, %v584
  %v659 = vmul.f32 %v105, %v589
  %v660 = vmul.f32 %v106, %v594
  %v661 = vmul.f32 %v107, %v599
  %v662 = vmul.f32 %v108, %v604
  %v663 = vmul.f32 %v109, %v609
  %v664 = vmul.f32 %v110, %v614
  %v665 = vmul.f32 %v111, %v619
  %v666 = vmul.f32 %v112, %v624
  %v667 = vmul.f32 %v113, %v629
  %v668 = vmul.f32 %v114, %v634
  %v669 = vmul.f32 %v115, %v639
  %v670 = vmul.f32 %v116, %v644
  %v671 = vmul.f32 %v117, %v649
  %v672 = vmul.f32 %v118, %v654
  %673 = vmatprep.subr.mxu0 0.0
  %674 = vmatpush1.msra.mxu0 %v657
  %675 = vmatprep.subr.mxu0 0.0
  %676 = vmatpush1.msra.mxu0 %v658
  %677 = vmatprep.subr.mxu0 0.0
  %678 = vmatpush1.msra.mxu0 %v659
  %679 = vmatprep.subr.mxu0 0.0
  %680 = vmatpush1.msra.mxu0 %v660
  %681 = vmatprep.subr.mxu0 0.0
  %682 = vmatpush1.msra.mxu0 %v661
  %683 = vmatprep.subr.mxu0 0.0
  %684 = vmatpush1.msra.mxu0 %v662
  %685 = vmatprep.subr.mxu0 0.0
  %686 = vmatpush1.msra.mxu0 %v663
  %687 = vmatprep.subr.mxu0 0.0
  %688 = vmatpush1.msra.mxu0 %v664
  %689 = vmatprep.subr.mxu0 0.0
  %690 = vmatpush1.msra.mxu0 %v665
  %691 = vmatprep.subr.mxu0 0.0
  %692 = vmatpush1.msra.mxu0 %v666
  %693 = vmatprep.subr.mxu0 0.0
  %694 = vmatpush1.msra.mxu0 %v667
  %695 = vmatprep.subr.mxu0 0.0
  %696 = vmatpush1.msra.mxu0 %v668
  %697 = vmatprep.subr.mxu0 0.0
  %698 = vmatpush1.msra.mxu0 %v669
  %699 = vmatprep.subr.mxu0 0.0
  %700 = vmatpush1.msra.mxu0 %v670
  %701 = vmatprep.subr.mxu0 0.0
  %702 = vmatpush1.msra.mxu0 %v671
  %703 = vmatprep.subr.mxu0 0.0
  %704 = vmatpush1.msra.mxu0 %v672
  %705 = vmatprep.subr.mxu0 0.0
  %706 = vmatpush1.msra.mxu0 0.0
  %707 = vmatprep.subr.mxu0 0.0
  %708 = vmatpush1.msra.mxu0 0.0
  %709 = vmatprep.subr.mxu0 0.0
  %710 = vmatpush1.msra.mxu0 0.0
  %711 = vmatprep.subr.mxu0 0.0
  %712 = vmatpush1.msra.mxu0 0.0
  %713 = vmatprep.subr.mxu0 0.0
  %714 = vmatpush1.msra.mxu0 0.0
  %715 = vmatprep.subr.mxu0 0.0
  %716 = vmatpush1.msra.mxu0 0.0
  %717 = vmatprep.subr.mxu0 0.0
  %718 = vmatpush1.msra.mxu0 0.0
  %719 = vmatprep.subr.mxu0 0.0
  %720 = vmatpush1.msra.mxu0 0.0
  %721 = vmatprep.subr.mxu0 0.0
  %722 = vmatpush1.msra.mxu0 0.0
  %723 = vmatprep.subr.mxu0 0.0
  %724 = vmatpush1.msra.mxu0 0.0
  %725 = vmatprep.subr.mxu0 0.0
  %726 = vmatpush1.msra.mxu0 0.0
  %727 = vmatprep.subr.mxu0 0.0
  %728 = vmatpush1.msra.mxu0 0.0
  %729 = vmatprep.subr.mxu0 0.0
  %730 = vmatpush1.msra.mxu0 0.0
  %731 = vmatprep.subr.mxu0 0.0
  %732 = vmatpush1.msra.mxu0 0.0
  %733 = vmatprep.subr.mxu0 0.0
  %734 = vmatpush1.msra.mxu0 0.0
  %735 = vmatprep.subr.mxu0 0.0
  %736 = vmatpush1.msra.mxu0 0.0
  %737 = vmatprep.mubr.f32.mxu0 0.0
  %738 = vmatmul.mubr.f32.gmra.mrb[0].mxu0 %v23
  %v739 = vpop.f32.mrb[0].mxu0
  %v740 = vadd.f32 %v657, %v739
  %v741 = vpop.f32.mrb[0].mxu0
  %742 = vmatprep.mubr.f32.mxu0 0.0
  %743 = vmatmul.mubr.f32.gmra.mrb[0].mxu0 %v24
  %v744 = vpop.f32.mrb[0].mxu0
  %v745 = vadd.f32 %v658, %v744
  %v746 = vpop.f32.mrb[0].mxu0
  %747 = vmatprep.mubr.f32.mxu0 0.0
  %748 = vmatmul.mubr.f32.gmra.mrb[0].mxu0 %v25
  %v749 = vpop.f32.mrb[0].mxu0
  %v750 = vadd.f32 %v659, %v749
  %v751 = vpop.f32.mrb[0].mxu0
  %752 = vmatprep.mubr.f32.mxu0 0.0
  %753 = vmatmul.mubr.f32.gmra.mrb[0].mxu0 %v26
  %v754 = vpop.f32.mrb[0].mxu0
  %v755 = vadd.f32 %v660, %v754
  %v756 = vpop.f32.mrb[0].mxu0
  %757 = vmatprep.mubr.f32.mxu0 0.0
  %758 = vmatmul.mubr.f32.gmra.mrb[0].mxu0 %v27
  %v759 = vpop.f32.mrb[0].mxu0
  %v760 = vadd.f32 %v661, %v759
  %v761 = vpop.f32.mrb[0].mxu0
  %762 = vmatprep.mubr.f32.mxu0 0.0
  %763 = vmatmul.mubr.f32.gmra.mrb[0].mxu0 %v28
  %v764 = vpop.f32.mrb[0].mxu0
  %v765 = vadd.f32 %v662, %v764
  %v766 = vpop.f32.mrb[0].mxu0
  %767 = vmatprep.mubr.f32.mxu0 0.0
  %768 = vmatmul.mubr.f32.gmra.mrb[0].mxu0 %v29
  %v769 = vpop.f32.mrb[0].mxu0
  %v770 = vadd.f32 %v663, %v769
  %v771 = vpop.f32.mrb[0].mxu0
  %772 = vmatprep.mubr.f32.mxu0 0.0
  %773 = vmatmul.mubr.f32.gmra.mrb[0].mxu0 %v30
  %v774 = vpop.f32.mrb[0].mxu0
  %v775 = vadd.f32 %v664, %v774
  %v776 = vpop.f32.mrb[0].mxu0
  %777 = vmatprep.mubr.f32.mxu0 0.0
  %778 = vmatmul.mubr.f32.gmra.mrb[0].mxu0 %v31
  %v779 = vpop.f32.mrb[0].mxu0
  %v780 = vadd.f32 %v665, %v779
  %v781 = vpop.f32.mrb[0].mxu0
  %782 = vmatprep.mubr.f32.mxu0 0.0
  %783 = vmatmul.mubr.f32.gmra.mrb[0].mxu0 %v32
  %v784 = vpop.f32.mrb[0].mxu0
  %v785 = vadd.f32 %v666, %v784
  %v786 = vpop.f32.mrb[0].mxu0
  %787 = vmatprep.mubr.f32.mxu0 0.0
  %788 = vmatmul.mubr.f32.gmra.mrb[0].mxu0 %v33
  %v789 = vpop.f32.mrb[0].mxu0
  %v790 = vadd.f32 %v667, %v789
  %v791 = vpop.f32.mrb[0].mxu0
  %792 = vmatprep.mubr.f32.mxu0 0.0
  %793 = vmatmul.mubr.f32.gmra.mrb[0].mxu0 %v34
  %v794 = vpop.f32.mrb[0].mxu0
  %v795 = vadd.f32 %v668, %v794
  %v796 = vpop.f32.mrb[0].mxu0
  %797 = vmatprep.mubr.f32.mxu0 0.0
  %798 = vmatmul.mubr.f32.gmra.mrb[0].mxu0 %v35
  %v799 = vpop.f32.mrb[0].mxu0
  %v800 = vadd.f32 %v669, %v799
  %v801 = vpop.f32.mrb[0].mxu0
  %802 = vmatprep.mubr.f32.mxu0 0.0
  %803 = vmatmul.mubr.f32.gmra.mrb[0].mxu0 %v36
  %v804 = vpop.f32.mrb[0].mxu0
  %v805 = vadd.f32 %v670, %v804
  %v806 = vpop.f32.mrb[0].mxu0
  %807 = vmatprep.mubr.f32.mxu0 0.0
  %808 = vmatmul.mubr.f32.gmra.mrb[0].mxu0 %v37
  %v809 = vpop.f32.mrb[0].mxu0
  %v810 = vadd.f32 %v671, %v809
  %v811 = vpop.f32.mrb[0].mxu0
  %812 = vmatprep.mubr.f32.mxu0 0.0
  %813 = vmatmul.mubr.f32.gmra.mrb[0].mxu0 %v38
  %v814 = vpop.f32.mrb[0].mxu0
  %v815 = vadd.f32 %v672, %v814
  %v816 = vpop.f32.mrb[0].mxu0
  %817 = vdwg.mxu0
  %v818 = vmul.f32 %v103, %v740
  %v819 = vmul.f32 %v104, %v745
  %v820 = vmul.f32 %v105, %v750
  %v821 = vmul.f32 %v106, %v755
  %v822 = vmul.f32 %v107, %v760
  %v823 = vmul.f32 %v108, %v765
  %v824 = vmul.f32 %v109, %v770
  %v825 = vmul.f32 %v110, %v775
  %v826 = vmul.f32 %v111, %v780
  %v827 = vmul.f32 %v112, %v785
  %v828 = vmul.f32 %v113, %v790
  %v829 = vmul.f32 %v114, %v795
  %v830 = vmul.f32 %v115, %v800
  %v831 = vmul.f32 %v116, %v805
  %v832 = vmul.f32 %v117, %v810
  %v833 = vmul.f32 %v118, %v815
  %v834 = vld [vmem:[%s5] sm:$0x1]
  %v836 = vlaneseq
  %v837 = vshrl.u32 %v836, 7
  %v838 = vsub.s32 0, %v837
  %v839 = vrot.slane %v834, %v838
  %v841 = vadd.f32 %v818, %v839
  %v842 = vadd.f32 %v819, %v839
  %v843 = vadd.f32 %v820, %v839
  %v844 = vadd.f32 %v821, %v839
  %v845 = vadd.f32 %v822, %v839
  %v846 = vadd.f32 %v823, %v839
  %v847 = vadd.f32 %v824, %v839
  %v848 = vadd.f32 %v825, %v839
  %v849 = vadd.f32 %v826, %v839
  %v850 = vadd.f32 %v827, %v839
  %v851 = vadd.f32 %v828, %v839
  %v852 = vadd.f32 %v829, %v839
  %v853 = vadd.f32 %v830, %v839
  %v854 = vadd.f32 %v831, %v839
  %v855 = vadd.f32 %v832, %v839
  %v856 = vadd.f32 %v833, %v839
  %857 = vst [vmem:[%s6] sm:$0xff] %v841
  %858 = vst [vmem:[%s6 + $0x8] sm:$0xff] %v842
  %859 = vst [vmem:[%s6 + $0x10] sm:$0xff] %v843
  %860 = vst [vmem:[%s6 + $0x18] sm:$0xff] %v844
  %861 = vst [vmem:[%s6 + $0x20] sm:$0xff] %v845
  %862 = vst [vmem:[%s6 + $0x28] sm:$0xff] %v846
  %863 = vst [vmem:[%s6 + $0x30] sm:$0xff] %v847
  %864 = vst [vmem:[%s6 + $0x38] sm:$0xff] %v848
  %865 = vst [vmem:[%s6 + $0x40] sm:$0xff] %v849
  %866 = vst [vmem:[%s6 + $0x48] sm:$0xff] %v850
  %867 = vst [vmem:[%s6 + $0x50] sm:$0xff] %v851
  %868 = vst [vmem:[%s6 + $0x58] sm:$0xff] %v852
  %869 = vst [vmem:[%s6 + $0x60] sm:$0xff] %v853
  %870 = vst [vmem:[%s6 + $0x68] sm:$0xff] %v854
  %871 = vst [vmem:[%s6 + $0x70] sm:$0xff] %v855
  %872 = vst [vmem:[%s6 + $0x78] sm:$0xff] %v856
  // Predicated region
  $region26: #{gcn_two_forward.1} parent=0 // pred_check
    _
  $region27: #{gcn_two_forward.1} parent=0 // pred_check_branch
    %874 = sbr.rel (0) target = $region29
  $region28: #{gcn_two_forward.1} parent=0 // pred_region
    _
  $region29: #{gcn_two_forward.1} parent=0 // pred_fallthru
    _
  // Predicated region
  $region30: #{gcn_two_forward.1} parent=0 // pred_check
    _
  $region31: #{gcn_two_forward.1} parent=0 // pred_check_branch
    %876 = sbr.rel (0) target = $region33
  $region32: #{gcn_two_forward.1} parent=0 // pred_region
    _
  $region33: #{gcn_two_forward.1} parent=0 // pred_fallthru
    _

</llo_original>
